<compile_context>
chip_gen: v6e
topology: v6e:2x2x1
jax: 0.10.0
libtpu: 0.0.40
codegen_flags: <defaults>
</compile_context>

<pallas_src>
import math

import jax
import jax.numpy as jnp
from jax.experimental import pallas as pl
from jax.experimental.pallas import tpu as pltpu

N_TERMS = 3           # exponential_terms in QuasiPolySynapse
LANES = 128
MAX_TILE_ROWS = 2048  # (2048, 128) f32 = 1 MiB per block

# Flat scalar-parameter layout (SMEM f32[12]); powers are baked statically.
#  [0:3] add_synapse.term_weights   [3:6] product_synapse1.term_weights
#  [6:9] product_synapse2.term_weights   [9] bias   [10] bias1   [11] bias2
P_ADD_W, P_P1_W, P_P2_W = 0, 3, 6
P_BIAS, P_BIAS1, P_BIAS2 = 9, 10, 11


def _pow_static(x, p):
    """x ** p with the exponent known at Python/trace time.

    Non-negative integer-valued powers become repeated multiplies (exact, no
    EUP transcendentals).  Other powers fall back to jnp.power, matching
    torch's float-pow semantics (NaN for negative base); that branch is never
    traced for the default init (power == 1.0).
    """
    p = float(p)
    if p == int(p) and p >= 0:
        ip = int(p)
        if ip == 0:
            return jnp.ones_like(x)
        y = x
        for _ in range(ip - 1):
            y = y * x
        return y
    return jnp.power(x, jnp.float32(p))


def _make_kernel(pow_add, pow_p1, pow_p2, up_add, up_p1, up_p2):
    """pow_* are Python floats; up_* = min(int(floor(power) - 1), N_TERMS)."""

    def synapse(params_ref, x, p_static, w_off, upper):
        # y = w[0] * x**power ; + w[i] * x**i for i in range(1, upper)
        y = params_ref[w_off] * _pow_static(x, p_static)
        for i in range(1, upper):  # static trip count (resolved at trace time)
            y = y + params_ref[w_off + i] * _pow_static(x, float(i))
        return y

    def kernel(params_ref, x0_ref, x1_ref, o_ref):
        x0 = x0_ref[...]  # (tile_rows, 128), lane-dense
        x1 = x1_ref[...]

        s1 = synapse(params_ref, x0, pow_add, P_ADD_W, up_add) + params_ref[P_BIAS]
        p1 = synapse(params_ref, x0, pow_p1, P_P1_W, up_p1) + params_ref[P_BIAS1]
        p2 = synapse(params_ref, x1, pow_p2, P_P2_W, up_p2) + params_ref[P_BIAS2]

        o_ref[...] = jax.nn.sigmoid(s1 + p1 * p2)

    return kernel


def _round_up(v, m):
    return (v + m - 1) // m * m


def network31_forward(x, params):
    """x: [B, 2] f32 -> [B, 1] f32 (matches Network31.forward)."""
    B, F = x.shape
    assert F == 2

    def upper(power_val):
        # mirrors: min(int(torch.floor(power).item() - 1), len(term_weights))
        return min(int(math.floor(float(power_val)) - 1), N_TERMS)

    flat = jnp.concatenate([
        params["add_w"], params["p1_w"], params["p2_w"],
        params["bias"], params["bias1"], params["bias2"],
    ]).astype(jnp.float32)

    kernel = _make_kernel(
        float(params["add_power"]), float(params["p1_power"]),
        float(params["p2_power"]),
        upper(params["add_power"]), upper(params["p1_power"]),
        upper(params["p2_power"]),
    )

    # Lane-dense layout: batch -> (rows_pad, 128) per feature.
    rows = pl.cdiv(B, LANES)
    tile_rows = min(MAX_TILE_ROWS, _round_up(rows, 8))
    rows_pad = _round_up(rows, tile_rows)
    b_pad = rows_pad * LANES

    x = x.astype(jnp.float32)
    x0 = x[:, 0]
    x1 = x[:, 1]
    if b_pad != B:
        x0 = jnp.pad(x0, (0, b_pad - B))
        x1 = jnp.pad(x1, (0, b_pad - B))
    x0 = x0.reshape(rows_pad, LANES)
    x1 = x1.reshape(rows_pad, LANES)

    out = pl.pallas_call(
        kernel,
        grid=(rows_pad // tile_rows,),
        out_shape=jax.ShapeDtypeStruct((rows_pad, LANES), jnp.float32),
        in_specs=[
            pl.BlockSpec(memory_space=pltpu.MemorySpace.SMEM),      # scalar params
            pl.BlockSpec((tile_rows, LANES), lambda i: (i, 0)),     # x0 tiles
            pl.BlockSpec((tile_rows, LANES), lambda i: (i, 0)),     # x1 tiles
        ],
        out_specs=pl.BlockSpec((tile_rows, LANES), lambda i: (i, 0)),
        compiler_params=pltpu.CompilerParams(
            dimension_semantics=("parallel",)),
    )(flat, x0, x1)

    return out.reshape(b_pad)[:B][:, None]


def network31_ref(x, params):
    """Pure-JAX reference of Network31.forward with power==1 (extra-term loop empty)."""
    x0, x1 = x[:, 0], x[:, 1]
    s1 = params["add_w"][0] * x0 + params["bias"][0]
    prod1 = params["p1_w"][0] * x0 + params["bias1"][0]
    prod2 = params["p2_w"][0] * x1 + params["bias2"][0]
    y = jax.nn.sigmoid(s1 + prod1 * prod2)
    return y[:, None]


if __name__ == "__main__":
    key = jax.random.PRNGKey(0)
    k1, k2, k3, k4, k5, k6, kx, kx2 = jax.random.split(key, 8)

    params = {
        "add_power": 1.0, "add_w": jax.random.normal(k1, (N_TERMS,), jnp.float32),
        "p1_power": 1.0, "p1_w": jax.random.normal(k2, (N_TERMS,), jnp.float32),
        "p2_power": 1.0, "p2_w": jax.random.normal(k3, (N_TERMS,), jnp.float32),
        "bias":  jax.random.normal(k4, (1,), jnp.float32),
        "bias1": jax.random.normal(k5, (1,), jnp.float32),
        "bias2": jax.random.normal(k6, (1,), jnp.float32),
    }

    # Small batch (exercises lane padding within one row).
    B = 8
    x = jax.random.normal(kx, (B, 2), jnp.float32)
    out = jax.block_until_ready(network31_forward(x, params))
    ref = network31_ref(x, params)
    assert out.shape == (B, 1)
    assert jnp.allclose(out, ref, atol=1e-5, rtol=1e-5)

    # Batch that is not a multiple of 128 (exercises row/sublane padding).
    B2 = 257
    x2 = jax.random.normal(kx2, (B2, 2), jnp.float32)
    out2 = jax.block_until_ready(network31_forward(x2, params))
    ref2 = network31_ref(x2, params)
    assert out2.shape == (B2, 1)
    assert jnp.allclose(out2, ref2, atol=1e-5, rtol=1e-5)

    print("KERNEL_OK")
</pallas_src>

<mosaic_0001>
module attributes {stable_mosaic.version = 11 : i64} {
  func.func @kernel(%arg0: i32, %arg1: memref<12xf32, #tpu.memory_space<smem>>, %arg2: memref<8x128xf32, #tpu.memory_space<vmem>>, %arg3: memref<8x128xf32, #tpu.memory_space<vmem>>, %arg4: memref<8x128xf32, #tpu.memory_space<vmem>>) attributes {dimension_semantics = [#tpu.dimension_semantics<parallel>], iteration_bounds = array<i64: 1>, scalar_prefetch = 0 : i64, scratch_operands = 0 : i64, tpu.core_type = #tpu.core_type<tc>, window_params = [{transform_indices = @transform_0, window_bounds = array<i64: 12>}, {transform_indices = @transform_1, window_bounds = array<i64: 8, 128>}, {transform_indices = @transform_2, window_bounds = array<i64: 8, 128>}, {transform_indices = @transform_3, window_bounds = array<i64: 8, 128>}]} {
    %c0 = arith.constant 0 : index
    %c0_0 = arith.constant 0 : index
    %0 = vector.load %arg2[%c0, %c0_0] : memref<8x128xf32, #tpu.memory_space<vmem>>, vector<8x128xf32>
    %c0_1 = arith.constant 0 : index
    %c0_2 = arith.constant 0 : index
    %1 = vector.load %arg3[%c0_1, %c0_2] : memref<8x128xf32, #tpu.memory_space<vmem>>, vector<8x128xf32>
    %c0_3 = arith.constant 0 : index
    %2 = memref.load %arg1[%c0_3] : memref<12xf32, #tpu.memory_space<smem>>
    %3 = vector.broadcast %2 : f32 to vector<8x128xf32>
    %4 = arith.mulf %3, %0 : vector<8x128xf32>
    %c9 = arith.constant 9 : index
    %5 = memref.load %arg1[%c9] : memref<12xf32, #tpu.memory_space<smem>>
    %6 = vector.broadcast %5 : f32 to vector<8x128xf32>
    %7 = arith.addf %4, %6 : vector<8x128xf32>
    %c3 = arith.constant 3 : index
    %8 = memref.load %arg1[%c3] : memref<12xf32, #tpu.memory_space<smem>>
    %9 = vector.broadcast %8 : f32 to vector<8x128xf32>
    %10 = arith.mulf %9, %0 : vector<8x128xf32>
    %c10 = arith.constant 10 : index
    %11 = memref.load %arg1[%c10] : memref<12xf32, #tpu.memory_space<smem>>
    %12 = vector.broadcast %11 : f32 to vector<8x128xf32>
    %13 = arith.addf %10, %12 : vector<8x128xf32>
    %c6 = arith.constant 6 : index
    %14 = memref.load %arg1[%c6] : memref<12xf32, #tpu.memory_space<smem>>
    %15 = vector.broadcast %14 : f32 to vector<8x128xf32>
    %16 = arith.mulf %15, %1 : vector<8x128xf32>
    %c11 = arith.constant 11 : index
    %17 = memref.load %arg1[%c11] : memref<12xf32, #tpu.memory_space<smem>>
    %18 = vector.broadcast %17 : f32 to vector<8x128xf32>
    %19 = arith.addf %16, %18 : vector<8x128xf32>
    %20 = arith.mulf %13, %19 : vector<8x128xf32>
    %21 = arith.addf %7, %20 : vector<8x128xf32>
    %22 = arith.negf %21 : vector<8x128xf32>
    %23 = math.exp %22 : vector<8x128xf32>
    %cst = arith.constant 1.000000e+00 : f32
    %24 = vector.broadcast %cst : f32 to vector<8x128xf32>
    %25 = arith.addf %24, %23 : vector<8x128xf32>
    %26 = arith.divf %24, %25 : vector<8x128xf32>
    %c0_4 = arith.constant 0 : index
    %c0_5 = arith.constant 0 : index
    %27 = vector.load %arg4[%c0_4, %c0_5] : memref<8x128xf32, #tpu.memory_space<vmem>>, vector<8x128xf32>
    tpu.vector_store %arg4[%c0_4, %c0_5], %26 {strides = array<i32>} : memref<8x128xf32, #tpu.memory_space<vmem>>, vector<8x128xf32>,
    return
  }
  func.func @transform_0(%arg0: i32) -> i32 {
    %c0_i32 = arith.constant 0 : i32
    %c0_i32_0 = arith.constant 0 : i32
    return %c0_i32 : i32
  }
  func.func @transform_1(%arg0: i32) -> (i32, i32) {
    %c0_i32 = arith.constant 0 : i32
    %c0_i32_0 = arith.constant 0 : i32
    return %arg0, %c0_i32 : i32, i32
  }
  func.func @transform_2(%arg0: i32) -> (i32, i32) {
    %c0_i32 = arith.constant 0 : i32
    %c0_i32_0 = arith.constant 0 : i32
    return %arg0, %c0_i32 : i32, i32
  }
  func.func @transform_3(%arg0: i32) -> (i32, i32) {
    %c0_i32 = arith.constant 0 : i32
    %c0_i32_0 = arith.constant 0 : i32
    return %arg0, %c0_i32 : i32, i32
  }
}

</mosaic_0001>

<llo_original>
// kernel: tpu_custom_call.1
$region0: #{tpu_custom_call.1}
  #allocation0 [shape = 'u32[]', space=smem, size = 0x4, offset = 0x4, fixed_abs, tag = 'smem constant byte address 0x4 - core index']
  #allocation1 [shape = 'u32[144,128]{1,0:T(1,128)}', space=vmem, size = 0x12000, scoped, tag = 'internal scratch']
  %s0 = inlined_call_operand.hbm [shape: f32[12], index: 0, kind: input, shape index: {}]
  %s1 = inlined_call_operand.hbm [shape: f32[8,128], index: 1, kind: input, shape index: {}]
  %s2 = inlined_call_operand.hbm [shape: f32[8,128], index: 2, kind: input, shape index: {}]
  %s3 = inlined_call_operand.hbm [shape: f32[8,128], index: 3, kind: output, shape index: {}]
  %s4 = sld [smem:[#allocation0]]
  $region34: #{tpu_custom_call.1} parent=0
    _
  %s6 = ssub.s32 1, %s4
  %s7 = scalar_select 0, %s6, %s4
  $region1: #{tpu_custom_call.1} parent=0
    #allocation2 [shape = 'u8[512]{0}', space=smem, size = 0x200, scoped, tag = 'input window, operand 0, single buffered']
    #allocation3 [shape = 's32[1]{0}', space=sflag, size = 0x4, scoped, tag = 'scoped memory for tpu_custom_call.1']
    #allocation4 [shape = 's32[1]{0}', space=sflag, size = 0x4, scoped, tag = 'scoped memory for tpu_custom_call.1']
    #allocation5 [shape = 's32[1]{0}', space=sflag, size = 0x4, scoped, tag = 'scoped memory for tpu_custom_call.1']
    #allocation6 [shape = 'u8[4096]{0}', space=vmem, size = 0x1000, scoped, tag = 'input window, operand 1, single buffered']
    #allocation7 [shape = 'u8[4096]{0}', space=vmem, size = 0x1000, scoped, tag = 'input window, operand 2, single buffered']
    #allocation8 [shape = 's32[1]{0}', space=sflag, size = 0x4, scoped, tag = 'scoped memory for tpu_custom_call.1']
    #allocation9 [shape = 'u8[4096]{0}', space=vmem, size = 0x1000, scoped, tag = 'output window, operand 0, single buffered']
    %8 = vsyncpa [#allocation5], 0
    %9 = vsyncpa [#allocation3], 0
    %10 = vsyncpa [#allocation8], 0
    %11 = vsyncpa [#allocation4], 0
    // Predicated region
    $region2: #{tpu_custom_call.1} parent=1 // pred_check
      _
    $region3: #{tpu_custom_call.1} parent=1 // pred_check_branch
      %13 = sbr.rel (0) target = $region5
    $region4: #{tpu_custom_call.1} parent=1 // pred_region
      %s15 = ssub.s32 16, 16
      %16 = vsyncadd [#allocation5], %s15
      %19 = dma.hbm_to_smem %s0, 16, [#allocation2], [#allocation5]
    $region5: #{tpu_custom_call.1} parent=1 // pred_fallthru
      _
    // Predicated region
    $region6: #{tpu_custom_call.1} parent=1 // pred_check
      _
    $region7: #{tpu_custom_call.1} parent=1 // pred_check_branch
      %21 = sbr.rel (0) target = $region9
    $region8: #{tpu_custom_call.1} parent=1 // pred_region
      %s23 = ssub.s32 128, 128
      %24 = vsyncadd [#allocation3], %s23
      %s26 = sshll.u32 [#allocation6], 4
      %s27 = int_to_ptr.vmem [resolvable:$true] %s26
      %29 = dma.hbm_to_vmem [thread:$0]  %s1, 128, %s27, [#allocation3]
    $region9: #{tpu_custom_call.1} parent=1 // pred_fallthru
      _
    // Predicated region
    $region10: #{tpu_custom_call.1} parent=1 // pred_check
      _
    $region11: #{tpu_custom_call.1} parent=1 // pred_check_branch
      %31 = sbr.rel (0) target = $region13
    $region12: #{tpu_custom_call.1} parent=1 // pred_region
      %s33 = ssub.s32 128, 128
      %34 = vsyncadd [#allocation8], %s33
      %s36 = sshll.u32 [#allocation7], 4
      %s37 = int_to_ptr.vmem [resolvable:$true] %s36
      %39 = dma.hbm_to_vmem [thread:$0]  %s2, 128, %s37, [#allocation8]
    $region13: #{tpu_custom_call.1} parent=1 // pred_fallthru
      _
    // Predicated region
    $region14: #{tpu_custom_call.1} parent=1 // pred_check
      _
    $region15: #{tpu_custom_call.1} parent=1 // pred_check_branch
      %41 = sbr.rel (0) target = $region17
    $region16: #{tpu_custom_call.1} parent=1 // pred_region
      %42 = dma.done [#allocation5], 16
    $region17: #{tpu_custom_call.1} parent=1 // pred_fallthru
      _
    // Predicated region
    $region18: #{tpu_custom_call.1} parent=1 // pred_check
      _
    $region19: #{tpu_custom_call.1} parent=1 // pred_check_branch
      %44 = sbr.rel (0) target = $region21
    $region20: #{tpu_custom_call.1} parent=1 // pred_region
      %45 = dma.done [#allocation3], 128
    $region21: #{tpu_custom_call.1} parent=1 // pred_fallthru
      _
    // Predicated region
    $region22: #{tpu_custom_call.1} parent=1 // pred_check
      _
    $region23: #{tpu_custom_call.1} parent=1 // pred_check_branch
      %47 = sbr.rel (0) target = $region25
    $region24: #{tpu_custom_call.1} parent=1 // pred_region
      %48 = dma.done [#allocation8], 128
    $region25: #{tpu_custom_call.1} parent=1 // pred_fallthru
      _
    %49 = sfence
    %v50 = vld [vmem:[#allocation6] sm:$0xff]
    %v51 = vld [vmem:[#allocation7] sm:$0xff]
    %s52 = sld [smem:[#allocation2]]
    %v53 = vstv %s52
    %v54 = vmul.f32 %v53, %v50
    %s55 = sld [smem:[#allocation2 + $0x9]]
    %v56 = vstv %s55
    %v57 = vadd.f32 %v54, %v56
    %s58 = sld [smem:[#allocation2 + $0x3]]
    %v59 = vstv %s58
    %v60 = vmul.f32 %v59, %v50
    %s61 = sld [smem:[#allocation2 + $0xa]]
    %v62 = vstv %s61
    %v63 = vadd.f32 %v60, %v62
    %s64 = sld [smem:[#allocation2 + $0x6]]
    %v65 = vstv %s64
    %v66 = vmul.f32 %v65, %v51
    %s67 = sld [smem:[#allocation2 + $0xb]]
    %v68 = vstv %s67
    %v69 = vadd.f32 %v66, %v68
    %v70 = vmul.f32 %v63, %v69
    %v71 = vadd.f32 %v57, %v70
    %v72 = vxor.u32 %v71, 2147483648
    %v73 = vmul.f32 %v72, 1.442695
    %v74 = vpow.pop %v73
    %v75 = vadd.f32 %v74, 1.0
    %v76 = vrcp.pop %v75
    %v77 = vmul.f32 1.0, %v76
    %78 = vst [vmem:[#allocation9] sm:$0xff] %v77
    // Predicated region
    $region26: #{tpu_custom_call.1} parent=1 // pred_check
      _
    $region27: #{tpu_custom_call.1} parent=1 // pred_check_branch
      %80 = sbr.rel (0) target = $region29
    $region28: #{tpu_custom_call.1} parent=1 // pred_region
      %s82 = ssub.s32 128, 128
      %83 = vsyncadd [#allocation4], %s82
      %s85 = sshll.u32 [#allocation9], 4
      %s86 = int_to_ptr.vmem [resolvable:$true] %s85
      %88 = dma.vmem_to_hbm [thread:$0]  %s86, 128, %s3, [#allocation4]
    $region29: #{tpu_custom_call.1} parent=1 // pred_fallthru
      _
    // Predicated region
    $region30: #{tpu_custom_call.1} parent=1 // pred_check
      _
    $region31: #{tpu_custom_call.1} parent=1 // pred_check_branch
      %90 = sbr.rel (0) target = $region33
    $region32: #{tpu_custom_call.1} parent=1 // pred_region
      %91 = dma.done [#allocation4], 128
    $region33: #{tpu_custom_call.1} parent=1 // pred_fallthru
      _
    %92 = vsyncpa [#allocation3], 1
    %93 = vsyncpa [#allocation8], 1
    %94 = vsyncpa [#allocation4], 1
    %95 = vsyncpa [#allocation5], 1

</llo_original>
